<compile_context>
chip_gen: v7x
topology: tpu7x:2x2x1
jax: 0.10.0
libtpu: 0.0.40
codegen_flags: <defaults>
</compile_context>

<pallas_src>
import math
import jax
import jax.numpy as jnp
from jax import lax
from jax.experimental import pallas as pl
from jax.experimental.pallas import tpu as pltpu


def _ge_kernel(x_ref, w_ref, out_ref):
    # x_ref:   (TM, K)   flattened (batch*seq) rows of node coordinates (K=2)
    # w_ref:   (K,  E)   folded weight (grid-invariant, VMEM-resident)
    # out_ref: (TM, E)   embedded rows (lane-dense: E is a multiple of 128)
    x = x_ref[...]
    w = w_ref[...]
    # K is tiny (2): do broadcast-FMAs on the VPU instead of an MXU matmul.
    acc = x[:, 0:1] * w[0:1, :]
    for k in range(1, x.shape[1]):                 # static unroll (K-1 adds)
        acc = acc + x[:, k:k + 1] * w[k:k + 1, :]
    out_ref[...] = acc.astype(out_ref.dtype)


def _round_up(x, m):
    return ((x + m - 1) // m) * m


def graph_embedding(inputs, params, use_sdne=True):
    """inputs: [B, 2, S].  Returns embedded: [B, S, ebd_size] float32."""
    B, in_dim, S = inputs.shape

    # ---- Fold the weight chain once (no nonlinearity between stages). ----
    w = params["embedding_1"].astype(jnp.float32)
    if use_sdne:
        w = jnp.dot(w, params["embedding_2"].astype(jnp.float32),
                    precision=lax.Precision.HIGHEST)
        w = jnp.dot(w, params["embedding_3"].astype(jnp.float32),
                    precision=lax.Precision.HIGHEST)
    ebd_out = w.shape[1]

    # [B, 2, S] -> [B*S, 2]  (row-major over (batch, seq) so output reshapes back)
    x = jnp.transpose(inputs.astype(jnp.float32), (0, 2, 1)).reshape(B * S, in_dim)

    M = B * S
    TM = min(2048, _round_up(M, 8))          # rows per grid step (multiple of 8)
    M_pad = _round_up(M, TM)
    if M_pad != M:
        x = jnp.pad(x, ((0, M_pad - M), (0, 0)))
    grid = (M_pad // TM,)

    x_spec = pl.BlockSpec((TM, in_dim), lambda i: (i, 0))
    # Grid-invariant full-array block: folded weight stays resident in VMEM.
    w_spec = pl.BlockSpec(w.shape, lambda i: (0, 0))
    out_spec = pl.BlockSpec((TM, ebd_out), lambda i: (i, 0))

    out_flat = pl.pallas_call(
        _ge_kernel,
        out_shape=jax.ShapeDtypeStruct((M_pad, ebd_out), jnp.float32),
        grid_spec=pltpu.PrefetchScalarGridSpec(
            num_scalar_prefetch=0,
            grid=grid,
            in_specs=[x_spec, w_spec],
            out_specs=out_spec,
        ),
        compiler_params=pltpu.CompilerParams(
            dimension_semantics=("parallel",)),
    )(x, w)

    return out_flat[:M].reshape(B, S, ebd_out)


def _make_params(key, input_size, ebd_size, use_sdne=True):
    # Matches the PyTorch uniform(-1/sqrt(ebd_k), 1/sqrt(ebd_k)) init.
    ebd1 = ebd_size * 4 if use_sdne else ebd_size
    ebd2 = ebd_size * 2
    ebd3 = ebd_size
    k1, k2, k3 = jax.random.split(key, 3)
    params = {
        "embedding_1": jax.random.uniform(
            k1, (input_size, ebd1), jnp.float32,
            -1.0 / math.sqrt(ebd1), 1.0 / math.sqrt(ebd1)),
    }
    if use_sdne:
        params["embedding_2"] = jax.random.uniform(
            k2, (ebd1, ebd2), jnp.float32,
            -1.0 / math.sqrt(ebd2), 1.0 / math.sqrt(ebd2))
        params["embedding_3"] = jax.random.uniform(
            k3, (ebd2, ebd3), jnp.float32,
            -1.0 / math.sqrt(ebd3), 1.0 / math.sqrt(ebd3))
    return params


def _reference(inputs, params, use_sdne=True):
    # Faithful pure-JAX port of the PyTorch per-position bmm loop
    # (staged matmuls, full f32 precision -- no folding here).
    x = jnp.transpose(inputs.astype(jnp.float32), (0, 2, 1))      # [B, S, 2]
    emb = jnp.einsum("bsk,ke->bse", x, params["embedding_1"],
                     precision=lax.Precision.HIGHEST)
    if use_sdne:
        emb = jnp.einsum("bse,ef->bsf", emb, params["embedding_2"],
                         precision=lax.Precision.HIGHEST)
        emb = jnp.einsum("bsf,fg->bsg", emb, params["embedding_3"],
                         precision=lax.Precision.HIGHEST)
    return emb


if __name__ == "__main__":
    # Small shapes consistent with the module: 2-D node coordinates embedded
    # into a 128-dim space (the module's stated embedding size).
    B, S = 2, 8
    input_size, ebd_size = 2, 128

    key = jax.random.PRNGKey(0)
    kp, kx = jax.random.split(key)
    params = _make_params(kp, input_size, ebd_size, use_sdne=True)
    inputs = jax.random.normal(kx, (B, input_size, S), jnp.float32)

    out = graph_embedding(inputs, params, use_sdne=True)
    jax.block_until_ready(out)

    ref = _reference(inputs, params, use_sdne=True)
    assert out.shape == (B, S, ebd_size)
    assert jnp.allclose(out, ref, atol=1e-5, rtol=1e-4), \
        float(jnp.max(jnp.abs(out - ref)))

    print("KERNEL_OK")
</pallas_src>

<mosaic_0001>
module attributes {stable_mosaic.version = 11 : i64} {
  func.func @_ge_kernel(%arg0: i32, %arg1: memref<16x2xf32, #tpu.memory_space<vmem>>, %arg2: memref<2x128xf32, #tpu.memory_space<vmem>>, %arg3: memref<16x128xf32, #tpu.memory_space<vmem>>) attributes {dimension_semantics = [#tpu.dimension_semantics<parallel>], iteration_bounds = array<i64: 1>, scalar_prefetch = 0 : i64, scratch_operands = 0 : i64, tpu.core_type = #tpu.core_type<tc>, window_params = [{transform_indices = @transform_0, window_bounds = array<i64: 16, 2>}, {pipeline_mode = #tpu.pipeline_mode<synchronous>, transform_indices = @transform_1, window_bounds = array<i64: 2, 128>}, {transform_indices = @transform_2, window_bounds = array<i64: 16, 128>}]} {
    %c0 = arith.constant 0 : index
    %c0_0 = arith.constant 0 : index
    %0 = vector.load %arg1[%c0, %c0_0] : memref<16x2xf32, #tpu.memory_space<vmem>>, vector<16x2xf32>
    %c0_1 = arith.constant 0 : index
    %c0_2 = arith.constant 0 : index
    %1 = vector.load %arg2[%c0_1, %c0_2] : memref<2x128xf32, #tpu.memory_space<vmem>>, vector<2x128xf32>
    %2 = vector.extract_strided_slice %0 {offsets = [0, 0], sizes = [16, 1], strides = [1, 1]} : vector<16x2xf32> to vector<16x1xf32>
    %3 = vector.extract_strided_slice %1 {offsets = [0, 0], sizes = [1, 128], strides = [1, 1]} : vector<2x128xf32> to vector<1x128xf32>
    %4 = vector.broadcast %2 : vector<16x1xf32> to vector<16x128xf32>
    %5 = vector.broadcast %3 : vector<1x128xf32> to vector<16x128xf32>
    %6 = arith.mulf %4, %5 : vector<16x128xf32>
    %7 = vector.extract_strided_slice %0 {offsets = [0, 1], sizes = [16, 1], strides = [1, 1]} : vector<16x2xf32> to vector<16x1xf32>
    %8 = vector.extract_strided_slice %1 {offsets = [1, 0], sizes = [1, 128], strides = [1, 1]} : vector<2x128xf32> to vector<1x128xf32>
    %9 = vector.broadcast %7 : vector<16x1xf32> to vector<16x128xf32>
    %10 = vector.broadcast %8 : vector<1x128xf32> to vector<16x128xf32>
    %11 = arith.mulf %9, %10 : vector<16x128xf32>
    %12 = arith.addf %6, %11 : vector<16x128xf32>
    %c0_3 = arith.constant 0 : index
    %c0_4 = arith.constant 0 : index
    %13 = vector.load %arg3[%c0_3, %c0_4] : memref<16x128xf32, #tpu.memory_space<vmem>>, vector<16x128xf32>
    tpu.vector_store %arg3[%c0_3, %c0_4], %12 {strides = array<i32>} : memref<16x128xf32, #tpu.memory_space<vmem>>, vector<16x128xf32>,
    return
  }
  func.func @transform_0(%arg0: i32) -> (i32, i32) {
    %c0_i32 = arith.constant 0 : i32
    %c0_i32_0 = arith.constant 0 : i32
    return %arg0, %c0_i32 : i32, i32
  }
  func.func @transform_1(%arg0: i32) -> (i32, i32) {
    %c0_i32 = arith.constant 0 : i32
    %c0_i32_0 = arith.constant 0 : i32
    %c0_i32_1 = arith.constant 0 : i32
    return %c0_i32, %c0_i32_0 : i32, i32
  }
  func.func @transform_2(%arg0: i32) -> (i32, i32) {
    %c0_i32 = arith.constant 0 : i32
    %c0_i32_0 = arith.constant 0 : i32
    return %arg0, %c0_i32 : i32, i32
  }
}

</mosaic_0001>

<llo_original>
// kernel: tpu_custom_call.1
$region0: #{tpu_custom_call.1}
  #allocation0 [shape = 'u32[]', space=smem, size = 0x4, offset = 0x4, fixed_abs, tag = 'smem constant byte address 0x4 - core index']
  #allocation1 [shape = 'u32[144,128]{1,0:T(1,128)}', space=vmem, size = 0x12000, scoped, tag = 'internal scratch']
  %s0 = inlined_call_operand.vmem [shape: f32[16,2], index: 0, kind: input, shape index: {}]
  %s1 = inlined_call_operand.vmem [shape: f32[2,128], index: 1, kind: input, shape index: {}]
  %s2 = inlined_call_operand.hbm [shape: f32[16,128], index: 2, kind: output, shape index: {}]
  %s3 = sld [smem:[#allocation0]]
  $region18: #{tpu_custom_call.1} parent=0
    _
  %s5 = ssub.s32 1, %s3
  %s6 = scalar_select 0, %s5, %s3
  $region1: #{tpu_custom_call.1} parent=0
    #allocation2 [shape = 'u8[8192]{0}', space=vmem, size = 0x2000, scoped, tag = 'output window, operand 0, single buffered']
    #allocation3 [shape = 's32[1]{0}', space=sflag, size = 0x4, scoped, tag = 'scoped memory for tpu_custom_call.1']
    %7 = vsyncpa [#allocation3], 0
    // Predicated region
    $region2: #{tpu_custom_call.1} parent=1 // pred_check
      _
    $region3: #{tpu_custom_call.1} parent=1 // pred_check_branch
      %9 = sbr.rel (0) target = $region5
    $region4: #{tpu_custom_call.1} parent=1 // pred_region
      _
    $region5: #{tpu_custom_call.1} parent=1 // pred_fallthru
      _
    // Predicated region
    $region6: #{tpu_custom_call.1} parent=1 // pred_check
      _
    $region7: #{tpu_custom_call.1} parent=1 // pred_check_branch
      %11 = sbr.rel (0) target = $region9
    $region8: #{tpu_custom_call.1} parent=1 // pred_region
      _
    $region9: #{tpu_custom_call.1} parent=1 // pred_fallthru
      _
    %v12 = vld [vmem:[%s0] sm:$0xff]
    %v13 = vld [vmem:[%s0 + $0x8] sm:$0xff]
    %v14 = vld [vmem:[%s1] sm:$0x3]
    %16 = vset.pattern.permute.xlu0 0
    %17 = vperm.xlu0 %16, %v12
    %v18 = vpop.permute.xlu0 %17
    %21 = vset.pattern.permute.xlu0 0
    %22 = vperm.xlu0 %21, %v13
    %v23 = vpop.permute.xlu0 %22
    %v25 = vlaneseq
    %v26 = vshrl.u32 %v25, 7
    %v27 = vsub.s32 0, %v26
    %v28 = vrot.slane %v14, %v27
    %v29 = vmul.f32 %v18, %v28
    %v30 = vmul.f32 %v23, %v28
    %31 = vset.pattern.permute.xlu0 1
    %32 = vperm.xlu0 %31, %v12
    %v33 = vpop.permute.xlu0 %32
    %35 = vset.pattern.permute.xlu0 1
    %36 = vperm.xlu0 %35, %v13
    %v37 = vpop.permute.xlu0 %36
    %v39 = vlaneseq
    %v40 = vshrl.u32 %v39, 7
    %v41 = vsub.s32 1, %v40
    %v42 = vrot.slane %v14, %v41
    %v43 = vmul.f32 %v33, %v42
    %v44 = vmul.f32 %v37, %v42
    %v45 = vadd.f32 %v29, %v43
    %v46 = vadd.f32 %v30, %v44
    %47 = vst [vmem:[#allocation2] sm:$0xff] %v45
    %48 = vst [vmem:[#allocation2 + $0x8] sm:$0xff] %v46
    // Predicated region
    $region10: #{tpu_custom_call.1} parent=1 // pred_check
      _
    $region11: #{tpu_custom_call.1} parent=1 // pred_check_branch
      %50 = sbr.rel (0) target = $region13
    $region12: #{tpu_custom_call.1} parent=1 // pred_region
      %s52 = ssub.s32 256, 256
      %53 = vsyncadd [#allocation3], %s52
      %s54 = sshll.u32 [#allocation2], 4
      %s55 = int_to_ptr.vmem [resolvable:$true] %s54
      %60 = dma.vmem_to_hbm [thread:$0]  %s55, 256, %s2, [#allocation3], 128, 128, 8
    $region13: #{tpu_custom_call.1} parent=1 // pred_fallthru
      _
    // Predicated region
    $region14: #{tpu_custom_call.1} parent=1 // pred_check
      _
    $region15: #{tpu_custom_call.1} parent=1 // pred_check_branch
      %62 = sbr.rel (0) target = $region17
    $region16: #{tpu_custom_call.1} parent=1 // pred_region
      %63 = dma.done [#allocation3], 256
    $region17: #{tpu_custom_call.1} parent=1 // pred_fallthru
      _
    %64 = vsyncpa [#allocation3], 1

</llo_original>
